<compile_context>
chip_gen: v7x
topology: tpu7x:2x2x1
jax: 0.10.0
libtpu: 0.0.40
codegen_flags: <defaults>
</compile_context>

<pallas_src>
import jax
import jax.numpy as jnp
from jax.experimental import pallas as pl
from jax.experimental.pallas import tpu as pltpu


# ----------------------------- parameter plumbing ---------------------------
def unconstraint(x):
    """Inverse softplus (pypolo linalg.unconstraint)."""
    return jnp.log(jnp.expm1(jnp.asarray(x, jnp.float32)))


def constraint(free_x):
    """Softplus (pypolo linalg.constraint)."""
    return jax.nn.softplus(free_x)


def _round_up(x: int, m: int) -> int:
    return ((x + m - 1) // m) * m


# ------------------------------- Pallas kernel ------------------------------
def _rbf_cov_kernel(logamp_ref, x1s_ref, x2t_ref, n1c_ref, n2c_ref, out_ref):
    """One (tm, tn) tile of the RBF covariance matrix.

    Constants are folded into the operands in the wrapper:
      x1s  = x1 * (-2c)                          (tm, D)
      x2t  = x2^T                                (D, tn)
      n1c  = c*||x1||^2 + log(amp)               (tm, 1)
      n2c  = c*||x2||^2                          (1, tn)   lane-dense
      logamp_ref (SMEM, (1,)) = log(amp)
    with c = -0.5 / lengthscale^2 (< 0), so
      cov = exp(min(n1c + n2c + x1s @ x2t, log_amp))
          = amp * exp(c * max(||x1-x2||^2, 0)).
    """
    log_amp = logamp_ref[0]
    cross = jnp.dot(x1s_ref[...], x2t_ref[...],
                    preferred_element_type=jnp.float32)            # (tm, tn)
    t = n1c_ref[...] + n2c_ref[...] + cross
    out_ref[...] = jnp.exp(jnp.minimum(t, log_amp)).astype(out_ref.dtype)


# --------------------------------- wrapper ----------------------------------
class PallasRBFKernel:
    """JAX/Pallas port of IKernel with an RBF forward."""

    def __init__(self, amplitude: float, lengthscale: float = 1.0):
        self._free_amplitude = unconstraint(amplitude)      # "Parameter"
        self._lengthscale = jnp.float32(lengthscale)

    @property
    def amplitude(self):
        return constraint(self._free_amplitude)

    @amplitude.setter
    def amplitude(self, amplitude: float) -> None:
        self._free_amplitude = unconstraint(amplitude)

    def forward(self, x_1, x_2, *, tm=512, tn=2048, out_dtype=jnp.float32):
        x_1 = jnp.asarray(x_1, jnp.float32)
        x_2 = jnp.asarray(x_2, jnp.float32)
        n1, d = x_1.shape
        n2, d2 = x_2.shape
        assert d == d2

        # Clamp tiles to the problem size (sublane/lane aligned: 8 / 128).
        tm = min(tm, _round_up(n1, 8))
        tn = min(tn, _round_up(n2, 128))
        # v7x has 2 TensorCores: make sure at least one parallel grid axis has
        # >= 2 blocks when the problem allows it (no-op on v5e/v6e, 1 TC).
        if pl.cdiv(n1, tm) == 1 and pl.cdiv(n2, tn) == 1:
            if n1 >= 16:
                tm = _round_up(pl.cdiv(n1, 2), 8)
            elif n2 >= 256:
                tn = _round_up(pl.cdiv(n2, 2), 128)

        grid_i = pl.cdiv(n1, tm)
        grid_j = pl.cdiv(n2, tn)

        # Fold constants into the operands (one-time XLA ops, off the hot path).
        amp = self.amplitude.astype(jnp.float32)
        c = (-0.5 / (self._lengthscale * self._lengthscale)).astype(jnp.float32)
        log_amp = jnp.log(amp)
        x1s = x_1 * (-2.0 * c)                                   # (N1, D)
        x2t = x_2.T                                              # (D, N2)
        n1c = c * jnp.sum(x_1 * x_1, axis=1, keepdims=True) + log_amp  # (N1, 1)
        n2c = (c * jnp.sum(x_2 * x_2, axis=1))[None, :]          # (1, N2) lane-dense
        params = log_amp.reshape(1)                              # (1,) f32 -> SMEM

        out_itemsize = jnp.dtype(out_dtype).itemsize

        # Bytes: x1s/n1c read once (i is the outer grid axis, block reused over
        # j), x2t/n2c re-read once per i-row, output written exactly once.
        cost = pl.CostEstimate(
            flops=2 * n1 * n2 * d + 3 * n1 * n2,
            transcendentals=n1 * n2,
            bytes_accessed=4 * (n1 * d + n1 + grid_i * (n2 * d + n2))
            + out_itemsize * n1 * n2,
        )

        # Scoped VMEM: double-buffered output tile dominates.  v5e default is
        # only 16 MiB, so raise it; stay well under v7x's 64 MiB physical VMEM.
        needed = 2 * (tm * tn * out_itemsize
                      + 4 * (tm * d + d * tn + tm + tn)) + (2 << 20)
        vmem_limit = max(needed, 32 << 20)

        cov = pl.pallas_call(
            _rbf_cov_kernel,
            out_shape=jax.ShapeDtypeStruct((n1, n2), out_dtype),
            grid=(grid_i, grid_j),
            in_specs=[
                pl.BlockSpec(memory_space=pltpu.MemorySpace.SMEM),   # log_amp
                pl.BlockSpec((tm, d), lambda i, j: (i, 0)),          # x1 * -2c
                pl.BlockSpec((d, tn), lambda i, j: (0, j)),          # x2^T
                pl.BlockSpec((tm, 1), lambda i, j: (i, 0)),          # c||x1||^2+log a
                pl.BlockSpec((1, tn), lambda i, j: (0, j)),          # c||x2||^2
            ],
            out_specs=pl.BlockSpec((tm, tn), lambda i, j: (i, j)),
            compiler_params=pltpu.CompilerParams(
                dimension_semantics=("parallel", "parallel"),
                vmem_limit_bytes=vmem_limit),
            cost_estimate=cost,
        )(params, x1s, x2t, n1c, n2c)

        return cov

    __call__ = forward

    def diag(self, x):
        # Pure broadcast of a scalar: an XLA fill is strictly faster than a
        # Pallas kernel doing masked 1-lane stores.
        n = x.shape[0]
        return jnp.full((n, 1), self.amplitude, jnp.float32)


# ----------------------------------- main -----------------------------------
if __name__ == "__main__":
    key = jax.random.PRNGKey(0)
    k1, k2 = jax.random.split(key)

    # Small shapes; N2 deliberately not a multiple of 128 to exercise the
    # masked boundary-tile stores (no host-side pad/slice anymore).
    N1, N2, D = 256, 192, 8
    x1 = jax.random.normal(k1, (N1, D), dtype=jnp.float32)
    x2 = jax.random.normal(k2, (N2, D), dtype=jnp.float32)

    kern = PallasRBFKernel(amplitude=1.5, lengthscale=0.8)

    cov = jax.block_until_ready(kern(x1, x2))
    var = jax.block_until_ready(kern.diag(x1))

    # Pure-JAX reference for correctness.
    amp = kern.amplitude
    inv_ls2 = 1.0 / (kern._lengthscale ** 2)
    sq = (
        jnp.sum(x1 * x1, axis=1, keepdims=True)
        + jnp.sum(x2 * x2, axis=1, keepdims=True).T
        - 2.0 * (x1 @ x2.T)
    )
    cov_ref = amp * jnp.exp(-0.5 * jnp.maximum(sq, 0.0) * inv_ls2)
    var_ref = amp * jnp.ones((N1, 1), jnp.float32)

    assert cov.shape == (N1, N2) and var.shape == (N1, 1)
    assert jnp.allclose(cov, cov_ref, atol=1e-4, rtol=1e-4)
    assert jnp.allclose(var, var_ref, atol=1e-6)

    print("KERNEL_OK")
</pallas_src>

<mosaic_0001>
module attributes {stable_mosaic.version = 11 : i64} {
  func.func @_rbf_cov_kernel(%arg0: i32, %arg1: i32, %arg2: memref<1xf32, #tpu.memory_space<smem>>, %arg3: memref<128x8xf32, #tpu.memory_space<vmem>>, %arg4: memref<8x256xf32, #tpu.memory_space<vmem>>, %arg5: memref<128x1xf32, #tpu.memory_space<vmem>>, %arg6: memref<1x256xf32, #tpu.memory_space<vmem>>, %arg7: memref<128x256xf32, #tpu.memory_space<vmem>>) attributes {dimension_semantics = [#tpu.dimension_semantics<parallel>, #tpu.dimension_semantics<parallel>], iteration_bounds = array<i64: 2, 1>, scalar_prefetch = 0 : i64, scratch_operands = 0 : i64, tpu.core_type = #tpu.core_type<tc>, window_params = [{transform_indices = @transform_0, window_bounds = array<i64: 1>}, {transform_indices = @transform_1, window_bounds = array<i64: 128, 8>}, {transform_indices = @transform_2, window_bounds = array<i64: 8, 256>}, {transform_indices = @transform_3, window_bounds = array<i64: 128, 1>}, {transform_indices = @transform_4, window_bounds = array<i64: 1, 256>}, {transform_indices = @transform_5, window_bounds = array<i64: 128, 256>}]} {
    %c0 = arith.constant 0 : index
    %0 = memref.load %arg2[%c0] : memref<1xf32, #tpu.memory_space<smem>>
    %c0_0 = arith.constant 0 : index
    %c0_1 = arith.constant 0 : index
    %1 = vector.load %arg3[%c0_0, %c0_1] : memref<128x8xf32, #tpu.memory_space<vmem>>, vector<128x8xf32>
    %c0_2 = arith.constant 0 : index
    %c0_3 = arith.constant 0 : index
    %2 = vector.load %arg4[%c0_2, %c0_3] : memref<8x256xf32, #tpu.memory_space<vmem>>, vector<8x256xf32>
    %cst = arith.constant dense<0.000000e+00> : vector<128x256xf32>
    %3 = tpu.matmul %1, %2, %cst {dimension_numbers = #tpu.dot_dimension_numbers<[1], [0], [0], [1], [0, 0, 1, 1], [], []>} : vector<128x8xf32>, vector<8x256xf32>, vector<128x256xf32> -> vector<128x256xf32>
    %c0_4 = arith.constant 0 : index
    %c0_5 = arith.constant 0 : index
    %4 = vector.load %arg5[%c0_4, %c0_5] : memref<128x1xf32, #tpu.memory_space<vmem>>, vector<128x1xf32>
    %c0_6 = arith.constant 0 : index
    %c0_7 = arith.constant 0 : index
    %5 = vector.load %arg6[%c0_6, %c0_7] : memref<1x256xf32, #tpu.memory_space<vmem>>, vector<1x256xf32>
    %6 = vector.broadcast %4 : vector<128x1xf32> to vector<128x256xf32>
    %7 = vector.broadcast %5 : vector<1x256xf32> to vector<128x256xf32>
    %8 = arith.addf %6, %7 : vector<128x256xf32>
    %9 = arith.addf %8, %3 : vector<128x256xf32>
    %10 = vector.broadcast %0 : f32 to vector<128x256xf32>
    %11 = arith.minimumf %9, %10 : vector<128x256xf32>
    %12 = math.exp %11 : vector<128x256xf32>
    %c0_8 = arith.constant 0 : index
    %c0_9 = arith.constant 0 : index
    %13 = vector.load %arg7[%c0_8, %c0_9] : memref<128x256xf32, #tpu.memory_space<vmem>>, vector<128x256xf32>
    tpu.vector_store %arg7[%c0_8, %c0_9], %12 {strides = array<i32>} : memref<128x256xf32, #tpu.memory_space<vmem>>, vector<128x256xf32>,
    return
  }
  func.func @transform_0(%arg0: i32, %arg1: i32) -> i32 {
    %c0_i32 = arith.constant 0 : i32
    %c0_i32_0 = arith.constant 0 : i32
    return %c0_i32 : i32
  }
  func.func @transform_1(%arg0: i32, %arg1: i32) -> (i32, i32) {
    %c0_i32 = arith.constant 0 : i32
    %c0_i32_0 = arith.constant 0 : i32
    return %arg0, %c0_i32 : i32, i32
  }
  func.func @transform_2(%arg0: i32, %arg1: i32) -> (i32, i32) {
    %c0_i32 = arith.constant 0 : i32
    %c0_i32_0 = arith.constant 0 : i32
    return %c0_i32, %arg1 : i32, i32
  }
  func.func @transform_3(%arg0: i32, %arg1: i32) -> (i32, i32) {
    %c0_i32 = arith.constant 0 : i32
    %c0_i32_0 = arith.constant 0 : i32
    return %arg0, %c0_i32 : i32, i32
  }
  func.func @transform_4(%arg0: i32, %arg1: i32) -> (i32, i32) {
    %c0_i32 = arith.constant 0 : i32
    %c0_i32_0 = arith.constant 0 : i32
    return %c0_i32, %arg1 : i32, i32
  }
  func.func @transform_5(%arg0: i32, %arg1: i32) -> (i32, i32) {
    %c0_i32 = arith.constant 0 : i32
    return %arg0, %arg1 : i32, i32
  }
}

</mosaic_0001>

<llo_original>
// kernel: tpu_custom_call.1
$region0: #{tpu_custom_call.1}
  #allocation0 [shape = 'u32[]', space=smem, size = 0x4, offset = 0x4, fixed_abs, tag = 'smem constant byte address 0x4 - core index']
  #allocation1 [shape = 'u32[144,128]{1,0:T(1,128)}', space=vmem, size = 0x12000, scoped, tag = 'internal scratch']
  #allocation2 [shape = 'f32[1]{0:T(128)S(6)}', space=smem, size = 0x200, scoped, tag = 'scoped memory for tpu_custom_call.1']
  %s0 = inlined_call_operand.<no memory space> [shape: f32[1], index: 0, kind: input, shape index: {}]
  %s1 = inlined_call_operand.vmem [shape: f32[256,8], index: 1, kind: input, shape index: {}]
  %s2 = inlined_call_operand.vmem [shape: f32[8,192], index: 2, kind: input, shape index: {}]
  %s3 = inlined_call_operand.vmem [shape: f32[256,1], index: 3, kind: input, shape index: {}]
  %s4 = inlined_call_operand.vmem [shape: f32[1,192], index: 4, kind: input, shape index: {}]
  %s5 = inlined_call_operand.vmem [shape: f32[256,192], index: 5, kind: output, shape index: {}]
  %s6 = sld [smem:[#allocation0]]
  $region53: #{tpu_custom_call.1} parent=0
    _
  %s8 = ssub.s32 1, %s6
  %s9 = scalar_select 0, %s8, %s6
  %10 = sst [smem:[#allocation2]] %s0
  loop: start=0, step=1, limit=4
  $region2: #{tpu_custom_call.1} parent=0 // loop_pre_header
    _
  $region3: #{tpu_custom_call.1} parent=0 // loop_header
    %s12 = sphi 0, %s16
    %p13 = scmp.ge.s32.totalorder %s12, 4
    %s19 = sphi 0, %s31
    %s20 = sphi 0, %s27
    %s21 = sphi 0, %s19
    %s22 = sphi 0, %s20
    %s23 = sphi 0, %s21
    %s24 = sphi 0, %s22
    %s32 = sphi 0, %s32
    %s34 = sphi 0, %s32
    %s35 = sphi 0, %s34
    %s49 = sphi 0, %s35
    %s55 = sphi 0, %s57
    %s58 = sphi 0, %s55
    %s59 = sphi 0, %s58
    %s75 = sphi 0, %s59
    %s81 = sphi 0, %s83
    %s84 = sphi 0, %s81
    %s85 = sphi 0, %s84
    %s101 = sphi 0, %s85
    %s107 = sphi 0, %s109
    %s110 = sphi 0, %s107
    %s111 = sphi 0, %s110
    %s127 = sphi 0, %s111
    %s133 = sphi 0, %s135
    %s136 = sphi 0, %s133
    %s137 = sphi 0, %s136
    %s153 = sphi 0, %s137
    %s161 = sphi 0, %s163
    %s164 = sphi 0, %s161
    %s165 = sphi 0, %s164
    %s181 = sphi 0, %s165
  $region4: #{tpu_custom_call.1} parent=0 // loop_header_branch
    %15 = sbr.rel (%p13) target = $region8
  $region5: #{tpu_custom_call.1} parent=0 // loop_body
    %s17 = ssub.s32 %s12, 1
    %s18 = ssub.s32 %s12, 2
    %s25 = sadd.s32 1, %s20
    %p26 = scmp.ge.s32.totalorder %s25, 1
    %s27 = scalar_select %p26, 0, %s25
    %s28 = sadd.s32 1, %s19
    %s29 = scalar_select %p26, %s28, %s19
    %p30 = scmp.ge.s32.totalorder %s29, 2
    %s31 = scalar_select %p30, 0, %s29
    %s33 = sadd.s32 %s32, 1
    %p36 = scmp.eq.s32.totalorder %s12, 1
    %p37 = scmp.ne.s32.totalorder %s32, %s34
    %p38 = scmp.eq.s32.totalorder %s12, 0
    %p39 = por %p37, %p38
    %p40 = scmp.ne.s32.totalorder %s32, %s34
    %p41 = scmp.eq.s32.totalorder %s17, 1
    %p42 = por %p40, %p41
    %p43 = scmp.ne.s32.totalorder %s34, %s35
    %p44 = scmp.eq.s32.totalorder %s17, 0
    %p45 = por %p43, %p44
    %p46 = scmp.ne.s32.totalorder %s34, %s35
    %p47 = scmp.eq.s32.totalorder %s18, 1
    %p48 = por %p46, %p47
    %p50 = scmp.ne.s32.totalorder %s35, %s49
    %p51 = scmp.eq.s32.totalorder %s18, 0
    %p52 = por %p50, %p51
    %s53 = ssub.s32 %s19, %s31
    %p54 = scmp.eq.s32.totalorder %s53, 0
    %s56 = sadd.s32 %s55, 1
    %s57 = scalar_select %p54, %s55, %s56
    %p60 = pneg %p54
    %p61 = scmp.eq.s32.totalorder %s12, 1
    %p62 = por %p60, %p61
    %p63 = scmp.ne.s32.totalorder %s55, %s58
    %p64 = scmp.eq.s32.totalorder %s12, 0
    %p65 = por %p63, %p64
    %p66 = scmp.ne.s32.totalorder %s55, %s58
    %p67 = scmp.eq.s32.totalorder %s17, 1
    %p68 = por %p66, %p67
    %p69 = scmp.ne.s32.totalorder %s58, %s59
    %p70 = scmp.eq.s32.totalorder %s17, 0
    %p71 = por %p69, %p70
    %p72 = scmp.ne.s32.totalorder %s58, %s59
    %p73 = scmp.eq.s32.totalorder %s18, 1
    %p74 = por %p72, %p73
    %p76 = scmp.ne.s32.totalorder %s59, %s75
    %p77 = scmp.eq.s32.totalorder %s18, 0
    %p78 = por %p76, %p77
    %s79 = ssub.s32 %s20, %s27
    %p80 = scmp.eq.s32.totalorder %s79, 0
    %s82 = sadd.s32 %s81, 1
    %s83 = scalar_select %p80, %s81, %s82
    %p86 = pneg %p80
    %p87 = scmp.eq.s32.totalorder %s12, 1
    %p88 = por %p86, %p87
    %p89 = scmp.ne.s32.totalorder %s81, %s84
    %p90 = scmp.eq.s32.totalorder %s12, 0
    %p91 = por %p89, %p90
    %p92 = scmp.ne.s32.totalorder %s81, %s84
    %p93 = scmp.eq.s32.totalorder %s17, 1
    %p94 = por %p92, %p93
    %p95 = scmp.ne.s32.totalorder %s84, %s85
    %p96 = scmp.eq.s32.totalorder %s17, 0
    %p97 = por %p95, %p96
    %p98 = scmp.ne.s32.totalorder %s84, %s85
    %p99 = scmp.eq.s32.totalorder %s18, 1
    %p100 = por %p98, %p99
    %p102 = scmp.ne.s32.totalorder %s85, %s101
    %p103 = scmp.eq.s32.totalorder %s18, 0
    %p104 = por %p102, %p103
    %s105 = ssub.s32 %s19, %s31
    %p106 = scmp.eq.s32.totalorder %s105, 0
    %s108 = sadd.s32 %s107, 1
    %s109 = scalar_select %p106, %s107, %s108
    %p112 = pneg %p106
    %p113 = scmp.eq.s32.totalorder %s12, 1
    %p114 = por %p112, %p113
    %p115 = scmp.ne.s32.totalorder %s107, %s110
    %p116 = scmp.eq.s32.totalorder %s12, 0
    %p117 = por %p115, %p116
    %p118 = scmp.ne.s32.totalorder %s107, %s110
    %p119 = scmp.eq.s32.totalorder %s17, 1
    %p120 = por %p118, %p119
    %p121 = scmp.ne.s32.totalorder %s110, %s111
    %p122 = scmp.eq.s32.totalorder %s17, 0
    %p123 = por %p121, %p122
    %p124 = scmp.ne.s32.totalorder %s110, %s111
    %p125 = scmp.eq.s32.totalorder %s18, 1
    %p126 = por %p124, %p125
    %p128 = scmp.ne.s32.totalorder %s111, %s127
    %p129 = scmp.eq.s32.totalorder %s18, 0
    %p130 = por %p128, %p129
    %s131 = ssub.s32 %s20, %s27
    %p132 = scmp.eq.s32.totalorder %s131, 0
    %s134 = sadd.s32 %s133, 1
    %s135 = scalar_select %p132, %s133, %s134
    %p138 = pneg %p132
    %p139 = scmp.eq.s32.totalorder %s12, 1
    %p140 = por %p138, %p139
    %p141 = scmp.ne.s32.totalorder %s133, %s136
    %p142 = scmp.eq.s32.totalorder %s12, 0
    %p143 = por %p141, %p142
    %p144 = scmp.ne.s32.totalorder %s133, %s136
    %p145 = scmp.eq.s32.totalorder %s17, 1
    %p146 = por %p144, %p145
    %p147 = scmp.ne.s32.totalorder %s136, %s137
    %p148 = scmp.eq.s32.totalorder %s17, 0
    %p149 = por %p147, %p148
    %p150 = scmp.ne.s32.totalorder %s136, %s137
    %p151 = scmp.eq.s32.totalorder %s18, 1
    %p152 = por %p150, %p151
    %p154 = scmp.ne.s32.totalorder %s137, %s153
    %p155 = scmp.eq.s32.totalorder %s18, 0
    %p156 = por %p154, %p155
    %s157 = ssub.s32 %s19, %s31
    %s158 = ssub.s32 %s20, %s27
    %s159 = sor.u32 %s157, %s158
    %p160 = scmp.eq.s32.totalorder %s159, 0
    %s162 = sadd.s32 %s161, 1
    %s163 = scalar_select %p160, %s161, %s162
    %p166 = pneg %p160
    %p167 = scmp.eq.s32.totalorder %s12, 1
    %p168 = por %p166, %p167
    %p169 = scmp.ne.s32.totalorder %s161, %s164
    %p170 = scmp.eq.s32.totalorder %s12, 0
    %p171 = por %p169, %p170
    %p172 = scmp.ne.s32.totalorder %s161, %s164
    %p173 = scmp.eq.s32.totalorder %s17, 1
    %p174 = por %p172, %p173
    %p175 = scmp.ne.s32.totalorder %s164, %s165
    %p176 = scmp.eq.s32.totalorder %s17, 0
    %p177 = por %p175, %p176
    %p178 = scmp.ne.s32.totalorder %s164, %s165
    %p179 = scmp.eq.s32.totalorder %s18, 1
    %p180 = por %p178, %p179
    %p182 = scmp.ne.s32.totalorder %s165, %s181
    %p183 = scmp.eq.s32.totalorder %s18, 0
    %p184 = por %p182, %p183
    %p185 = scmp.le.s32.totalorder 1, %s12
    %p186 = scmp.lt.s32.totalorder %s12, 3
    %p187 = pnand %p185, %p186
    %p188 = pneg %p187
    // Predicated region
    $region9: #{tpu_custom_call.1} parent=5 // pred_check
      _
    $region10: #{tpu_custom_call.1} parent=5 // pred_check_branch
      %190 = sbr.rel (%p187) target = $region12
    $region11: #{tpu_custom_call.1} parent=5 // pred_region
      %s191 = ssub.s32 %s12, 1
      // Predicated region
      $region13: #{tpu_custom_call.1} parent=11 // pred_check
        %p192 = pneg %p45
      $region14: #{tpu_custom_call.1} parent=11 // pred_check_branch
        %194 = sbr.rel (%p192) target = $region16
      $region15: #{tpu_custom_call.1} parent=11 // pred_region
        _
      $region16: #{tpu_custom_call.1} parent=11 // pred_fallthru
        _
      // Predicated region
      $region17: #{tpu_custom_call.1} parent=11 // pred_check
        %p195 = pneg %p97
      $region18: #{tpu_custom_call.1} parent=11 // pred_check_branch
        %197 = sbr.rel (%p195) target = $region20
      $region19: #{tpu_custom_call.1} parent=11 // pred_region
        %s198 = smul.u32 2, %s22
        %p199 = scmp.lt.s32.totalorder %s198, 1
        %s200 = scalar_select %p199, %s198, 1
        %s201 = smul.addr %s200, 8
        %s202 = scalar_lea.vmem %s2, %s201
        %s203 = smul.u32 2, %s22
      $region20: #{tpu_custom_call.1} parent=11 // pred_fallthru
        _
      // Predicated region
      $region21: #{tpu_custom_call.1} parent=11 // pred_check
        %p204 = pneg %p149
      $region22: #{tpu_custom_call.1} parent=11 // pred_check_branch
        %206 = sbr.rel (%p204) target = $region24
      $region23: #{tpu_custom_call.1} parent=11 // pred_region
        %s207 = smul.u32 2, %s22
        %p208 = scmp.lt.s32.totalorder %s207, 1
        %s209 = scalar_select %p208, %s207, 1
        %s210 = scalar_lea.vmem %s4, %s209
        %s211 = smul.u32 2, %s22
      $region24: #{tpu_custom_call.1} parent=11 // pred_fallthru
        _
    $region12: #{tpu_custom_call.1} parent=5 // pred_fallthru
      _
    %p212 = scmp.lt.s32.totalorder %s12, 2
    // Predicated region
    $region25: #{tpu_custom_call.1} parent=5 // pred_check
      %p213 = pneg %p212
    $region26: #{tpu_custom_call.1} parent=5 // pred_check_branch
      %215 = sbr.rel (%p213) target = $region28
    $region27: #{tpu_custom_call.1} parent=5 // pred_region
      // Predicated region
      $region29: #{tpu_custom_call.1} parent=27 // pred_check
        %p216 = pneg %p65
      $region30: #{tpu_custom_call.1} parent=27 // pred_check_branch
        %218 = sbr.rel (%p216) target = $region32
      $region31: #{tpu_custom_call.1} parent=27 // pred_region
        %s219 = smul.u32 16, %s19
        %p220 = scmp.lt.s32.totalorder %s219, 31
        %s221 = scalar_select %p220, %s219, 31
        %s222 = smul.addr %s221, 8
        %s223 = scalar_lea.vmem %s1, %s222
        %s224 = smul.u32 16, %s19
      $region32: #{tpu_custom_call.1} parent=27 // pred_fallthru
        _
      // Predicated region
      $region33: #{tpu_custom_call.1} parent=27 // pred_check
        %p225 = pneg %p117
      $region34: #{tpu_custom_call.1} parent=27 // pred_check_branch
        %227 = sbr.rel (%p225) target = $region36
      $region35: #{tpu_custom_call.1} parent=27 // pred_region
        %s228 = smul.u32 16, %s19
        %p229 = scmp.lt.s32.totalorder %s228, 31
        %s230 = scalar_select %p229, %s228, 31
        %s231 = smul.addr %s230, 8
        %s232 = scalar_lea.vmem %s3, %s231
        %s233 = smul.u32 16, %s19
      $region36: #{tpu_custom_call.1} parent=27 // pred_fallthru
        _
    $region28: #{tpu_custom_call.1} parent=5 // pred_fallthru
      _
    %p234 = scmp.le.s32.totalorder 1, %s12
    %p235 = scmp.lt.s32.totalorder %s12, 3
    %p236 = pnand %p234, %p235
    %p237 = pneg %p236
    // Predicated region
    $region37: #{tpu_custom_call.1} parent=5 // pred_check
      _
    $region38: #{tpu_custom_call.1} parent=5 // pred_check_branch
      %239 = sbr.rel (%p236) target = $region40
    $region39: #{tpu_custom_call.1} parent=5 // pred_region
      %s240 = ssub.s32 %s12, 1
      %p241 = pneg %p45
      %p242 = pneg %p42
      %s243 = smul.u32 16, %s21
      %p244 = scmp.lt.s32.totalorder %s243, 31
      %s245 = scalar_select %p244, %s243, 31
      %s246 = smul.addr %s245, 8
      %s247 = scalar_lea.vmem %s1, %s246
      %p248 = pneg %p71
      %p249 = pneg %p68
      %s250 = smul.u32 2, %s22
      %p251 = scmp.lt.s32.totalorder %s250, 1
      %s252 = scalar_select %p251, %s250, 1
      %s253 = smul.addr %s252, 8
      %s254 = scalar_lea.vmem %s2, %s253
      %p255 = pneg %p97
      %p256 = pneg %p94
      %s257 = smul.u32 16, %s21
      %p258 = scmp.lt.s32.totalorder %s257, 31
      %s259 = scalar_select %p258, %s257, 31
      %s260 = smul.addr %s259, 8
      %s261 = scalar_lea.vmem %s3, %s260
      %p262 = pneg %p123
      %p263 = pneg %p120
      %s264 = smul.u32 2, %s22
      %p265 = scmp.lt.s32.totalorder %s264, 1
      %s266 = scalar_select %p265, %s264, 1
      %s267 = scalar_lea.vmem %s4, %s266
      %p268 = pneg %p149
      %p269 = pneg %p146
      %p270 = pneg %p177
      %p271 = pneg %p174
      %s272 = smul.u32 16, %s21
      %s273 = smul.u32 2, %s22
      %p274 = scmp.lt.s32.totalorder %s272, 31
      %s275 = scalar_select %p274, %s272, 31
      %p276 = scmp.lt.s32.totalorder %s273, 1
      %s277 = scalar_select %p276, %s273, 1
      %s278 = smul.addr %s275, 2
      %s279 = sadd.s32 %s277, %s278
      %s280 = smul.addr %s279, 8
      %s281 = scalar_lea.vmem %s5, %s280
      %s282 = smul.u32 16, %s21
      %p283 = scmp.lt.s32.totalorder %s282, 31
      %s284 = scalar_select %p283, %s282, 31
      %s285 = smul.addr %s284, 8
      %s286 = scalar_lea.vmem %s1, %s285
      %s287 = smul.u32 16, %s21
      %s288 = smul.u32 2, %s22
      %p289 = scmp.lt.s32.totalorder %s288, 1
      %s290 = scalar_select %p289, %s288, 1
      %s291 = smul.addr %s290, 8
      %s292 = scalar_lea.vmem %s2, %s291
      %s293 = smul.u32 2, %s22
      %s294 = smul.u32 16, %s21
      %p295 = scmp.lt.s32.totalorder %s294, 31
      %s296 = scalar_select %p295, %s294, 31
      %s297 = smul.addr %s296, 8
      %s298 = scalar_lea.vmem %s3, %s297
      %s299 = smul.u32 16, %s21
      %s300 = smul.u32 2, %s22
      %p301 = scmp.lt.s32.totalorder %s300, 1
      %s302 = scalar_select %p301, %s300, 1
      %s303 = scalar_lea.vmem %s4, %s302
      %s304 = smul.u32 2, %s22
      %s305 = smul.u32 16, %s21
      %s306 = smul.u32 2, %s22
      %p307 = scmp.lt.s32.totalorder %s305, 31
      %s308 = scalar_select %p307, %s305, 31
      %p309 = scmp.lt.s32.totalorder %s306, 1
      %s310 = scalar_select %p309, %s306, 1
      %s311 = smul.addr %s308, 2
      %s312 = sadd.s32 %s310, %s311
      %s313 = smul.addr %s312, 8
      %s314 = scalar_lea.vmem %s5, %s313
      %s315 = smul.u32 16, %s21
      %s316 = smul.u32 2, %s22
      %s317 = sld [smem:[#allocation2]]
      %v318 = vld [vmem:[%s286] sm:$0xff]
      %v319 = vld [vmem:[%s286 + $0x8] sm:$0xff]
      %v320 = vld [vmem:[%s286 + $0x10] sm:$0xff]
      %v321 = vld [vmem:[%s286 + $0x18] sm:$0xff]
      %v322 = vld [vmem:[%s286 + $0x20] sm:$0xff]
      %v323 = vld [vmem:[%s286 + $0x28] sm:$0xff]
      %v324 = vld [vmem:[%s286 + $0x30] sm:$0xff]
      %v325 = vld [vmem:[%s286 + $0x38] sm:$0xff]
      %v326 = vld [vmem:[%s286 + $0x40] sm:$0xff]
      %v327 = vld [vmem:[%s286 + $0x48] sm:$0xff]
      %v328 = vld [vmem:[%s286 + $0x50] sm:$0xff]
      %v329 = vld [vmem:[%s286 + $0x58] sm:$0xff]
      %v330 = vld [vmem:[%s286 + $0x60] sm:$0xff]
      %v331 = vld [vmem:[%s286 + $0x68] sm:$0xff]
      %v332 = vld [vmem:[%s286 + $0x70] sm:$0xff]
      %v333 = vld [vmem:[%s286 + $0x78] sm:$0xff]
      %v334 = vld [vmem:[%s292] sm:$0xff]
      %v335 = vld [vmem:[%s292 + $0x8] sm:$0xff]
      %vm336 = vcmask 64512
      %v338 = vsel %vm336, %v318, 0
      %v341 = vsel %vm336, %v319, 0
      %v344 = vsel %vm336, %v320, 0
      %v347 = vsel %vm336, %v321, 0
      %v350 = vsel %vm336, %v322, 0
      %v353 = vsel %vm336, %v323, 0
      %v356 = vsel %vm336, %v324, 0
      %v359 = vsel %vm336, %v325, 0
      %v362 = vsel %vm336, %v326, 0
      %v365 = vsel %vm336, %v327, 0
      %v368 = vsel %vm336, %v328, 0
      %v371 = vsel %vm336, %v329, 0
      %v374 = vsel %vm336, %v330, 0
      %v377 = vsel %vm336, %v331, 0
      %v380 = vsel %vm336, %v332, 0
      %v383 = vsel %vm336, %v333, 0
      %385 = vmatprep.subr.mxu0 %v335
      %386 = vmatpush1.msra.mxu0 %v334
      %387 = vmatprep.subr.mxu0 0.0
      %388 = vmatpush1.msra.mxu0 0.0
      %389 = vmatprep.subr.mxu0 0.0
      %390 = vmatpush1.msra.mxu0 0.0
      %391 = vmatprep.subr.mxu0 0.0
      %392 = vmatpush1.msra.mxu0 0.0
      %393 = vmatprep.subr.mxu0 0.0
      %394 = vmatpush1.msra.mxu0 0.0
      %395 = vmatprep.subr.mxu0 0.0
      %396 = vmatpush1.msra.mxu0 0.0
      %397 = vmatprep.subr.mxu0 0.0
      %398 = vmatpush1.msra.mxu0 0.0
      %399 = vmatprep.subr.mxu0 0.0
      %400 = vmatpush1.msra.mxu0 0.0
      %401 = vmatprep.subr.mxu0 0.0
      %402 = vmatpush1.msra.mxu0 0.0
      %403 = vmatprep.subr.mxu0 0.0
      %404 = vmatpush1.msra.mxu0 0.0
      %405 = vmatprep.subr.mxu0 0.0
      %406 = vmatpush1.msra.mxu0 0.0
      %407 = vmatprep.subr.mxu0 0.0
      %408 = vmatpush1.msra.mxu0 0.0
      %409 = vmatprep.subr.mxu0 0.0
      %410 = vmatpush1.msra.mxu0 0.0
      %411 = vmatprep.subr.mxu0 0.0
      %412 = vmatpush1.msra.mxu0 0.0
      %413 = vmatprep.subr.mxu0 0.0
      %414 = vmatpush1.msra.mxu0 0.0
      %415 = vmatprep.subr.mxu0 0.0
      %416 = vmatpush1.msra.mxu0 0.0
      %417 = vmatprep.subr.mxu0 0.0
      %418 = vmatpush1.msra.mxu0 0.0
      %419 = vmatprep.subr.mxu0 0.0
      %420 = vmatpush1.msra.mxu0 0.0
      %421 = vmatprep.subr.mxu0 0.0
      %422 = vmatpush1.msra.mxu0 0.0
      %423 = vmatprep.subr.mxu0 0.0
      %424 = vmatpush1.msra.mxu0 0.0
      %425 = vmatprep.subr.mxu0 0.0
      %426 = vmatpush1.msra.mxu0 0.0
      %427 = vmatprep.subr.mxu0 0.0
      %428 = vmatpush1.msra.mxu0 0.0
      %429 = vmatprep.subr.mxu0 0.0
      %430 = vmatpush1.msra.mxu0 0.0
      %431 = vmatprep.subr.mxu0 0.0
      %432 = vmatpush1.msra.mxu0 0.0
      %433 = vmatprep.subr.mxu0 0.0
      %434 = vmatpush1.msra.mxu0 0.0
      %435 = vmatprep.subr.mxu0 0.0
      %436 = vmatpush1.msra.mxu0 0.0
      %437 = vmatprep.subr.mxu0 0.0
      %438 = vmatpush1.msra.mxu0 0.0
      %439 = vmatprep.subr.mxu0 0.0
      %440 = vmatpush1.msra.mxu0 0.0
      %441 = vmatprep.subr.mxu0 0.0
      %442 = vmatpush1.msra.mxu0 0.0
      %443 = vmatprep.subr.mxu0 0.0
      %444 = vmatpush1.msra.mxu0 0.0
      %445 = vmatprep.subr.mxu0 0.0
      %446 = vmatpush1.msra.mxu0 0.0
      %447 = vmatprep.subr.mxu0 0.0
      %448 = vmatpush1.msra.mxu0 0.0
      %449 = vmatprep.mubr.f32.mxu0 0.0
      %450 = vmatmul.mubr.f32.gmra.mrb[0].mxu0 %v338
      %v451 = vpop.f32.mrb[0].mxu0
      %v452 = vadd.f32 0.0, %v451
      %v453 = vpop.f32.mrb[0].mxu0
      %v454 = vadd.f32 0.0, %v453
      %455 = vmatprep.mubr.f32.mxu0 0.0
      %456 = vmatmul.mubr.f32.gmra.mrb[0].mxu0 %v341
      %v457 = vpop.f32.mrb[0].mxu0
      %v458 = vadd.f32 0.0, %v457
      %v459 = vpop.f32.mrb[0].mxu0
      %v460 = vadd.f32 0.0, %v459
      %461 = vmatprep.mubr.f32.mxu0 0.0
      %462 = vmatmul.mubr.f32.gmra.mrb[0].mxu0 %v344
      %v463 = vpop.f32.mrb[0].mxu0
      %v464 = vadd.f32 0.0, %v463
      %v465 = vpop.f32.mrb[0].mxu0
      %v466 = vadd.f32 0.0, %v465
      %467 = vmatprep.mubr.f32.mxu0 0.0
      %468 = vmatmul.mubr.f32.gmra.mrb[0].mxu0 %v347
      %v469 = vpop.f32.mrb[0].mxu0
      %v470 = vadd.f32 0.0, %v469
      %v471 = vpop.f32.mrb[0].mxu0
      %v472 = vadd.f32 0.0, %v471
      %473 = vmatprep.mubr.f32.mxu0 0.0
      %474 = vmatmul.mubr.f32.gmra.mrb[0].mxu0 %v350
      %v475 = vpop.f32.mrb[0].mxu0
      %v476 = vadd.f32 0.0, %v475
      %v477 = vpop.f32.mrb[0].mxu0
      %v478 = vadd.f32 0.0, %v477
      %479 = vmatprep.mubr.f32.mxu0 0.0
      %480 = vmatmul.mubr.f32.gmra.mrb[0].mxu0 %v353
      %v481 = vpop.f32.mrb[0].mxu0
      %v482 = vadd.f32 0.0, %v481
      %v483 = vpop.f32.mrb[0].mxu0
      %v484 = vadd.f32 0.0, %v483
      %485 = vmatprep.mubr.f32.mxu0 0.0
      %486 = vmatmul.mubr.f32.gmra.mrb[0].mxu0 %v356
      %v487 = vpop.f32.mrb[0].mxu0
      %v488 = vadd.f32 0.0, %v487
      %v489 = vpop.f32.mrb[0].mxu0
      %v490 = vadd.f32 0.0, %v489
      %491 = vmatprep.mubr.f32.mxu0 0.0
      %492 = vmatmul.mubr.f32.gmra.mrb[0].mxu0 %v359
      %v493 = vpop.f32.mrb[0].mxu0
      %v494 = vadd.f32 0.0, %v493
      %v495 = vpop.f32.mrb[0].mxu0
      %v496 = vadd.f32 0.0, %v495
      %497 = vmatprep.mubr.f32.mxu0 0.0
      %498 = vmatmul.mubr.f32.gmra.mrb[0].mxu0 %v362
      %v499 = vpop.f32.mrb[0].mxu0
      %v500 = vadd.f32 0.0, %v499
      %v501 = vpop.f32.mrb[0].mxu0
      %v502 = vadd.f32 0.0, %v501
      %503 = vmatprep.mubr.f32.mxu0 0.0
      %504 = vmatmul.mubr.f32.gmra.mrb[0].mxu0 %v365
      %v505 = vpop.f32.mrb[0].mxu0
      %v506 = vadd.f32 0.0, %v505
      %v507 = vpop.f32.mrb[0].mxu0
      %v508 = vadd.f32 0.0, %v507
      %509 = vmatprep.mubr.f32.mxu0 0.0
      %510 = vmatmul.mubr.f32.gmra.mrb[0].mxu0 %v368
      %v511 = vpop.f32.mrb[0].mxu0
      %v512 = vadd.f32 0.0, %v511
      %v513 = vpop.f32.mrb[0].mxu0
      %v514 = vadd.f32 0.0, %v513
      %515 = vmatprep.mubr.f32.mxu0 0.0
      %516 = vmatmul.mubr.f32.gmra.mrb[0].mxu0 %v371
      %v517 = vpop.f32.mrb[0].mxu0
      %v518 = vadd.f32 0.0, %v517
      %v519 = vpop.f32.mrb[0].mxu0
      %v520 = vadd.f32 0.0, %v519
      %521 = vmatprep.mubr.f32.mxu0 0.0
      %522 = vmatmul.mubr.f32.gmra.mrb[0].mxu0 %v374
      %v523 = vpop.f32.mrb[0].mxu0
      %v524 = vadd.f32 0.0, %v523
      %v525 = vpop.f32.mrb[0].mxu0
      %v526 = vadd.f32 0.0, %v525
      %527 = vmatprep.mubr.f32.mxu0 0.0
      %528 = vmatmul.mubr.f32.gmra.mrb[0].mxu0 %v377
      %v529 = vpop.f32.mrb[0].mxu0
      %v530 = vadd.f32 0.0, %v529
      %v531 = vpop.f32.mrb[0].mxu0
      %v532 = vadd.f32 0.0, %v531
      %533 = vmatprep.mubr.f32.mxu0 0.0
      %534 = vmatmul.mubr.f32.gmra.mrb[0].mxu0 %v380
      %v535 = vpop.f32.mrb[0].mxu0
      %v536 = vadd.f32 0.0, %v535
      %v537 = vpop.f32.mrb[0].mxu0
      %v538 = vadd.f32 0.0, %v537
      %539 = vmatprep.mubr.f32.mxu0 0.0
      %540 = vmatmul.mubr.f32.gmra.mrb[0].mxu0 %v383
      %v541 = vpop.f32.mrb[0].mxu0
      %v542 = vadd.f32 0.0, %v541
      %v543 = vpop.f32.mrb[0].mxu0
      %v544 = vadd.f32 0.0, %v543
      %545 = vdwg.mxu0
      %v546 = vld [vmem:[%s298] sm:$0xff]
      %v547 = vld [vmem:[%s298 + $0x8] sm:$0xff]
      %v548 = vld [vmem:[%s298 + $0x10] sm:$0xff]
      %v549 = vld [vmem:[%s298 + $0x18] sm:$0xff]
      %v550 = vld [vmem:[%s298 + $0x20] sm:$0xff]
      %v551 = vld [vmem:[%s298 + $0x28] sm:$0xff]
      %v552 = vld [vmem:[%s298 + $0x30] sm:$0xff]
      %v553 = vld [vmem:[%s298 + $0x38] sm:$0xff]
      %v554 = vld [vmem:[%s298 + $0x40] sm:$0xff]
      %v555 = vld [vmem:[%s298 + $0x48] sm:$0xff]
      %v556 = vld [vmem:[%s298 + $0x50] sm:$0xff]
      %v557 = vld [vmem:[%s298 + $0x58] sm:$0xff]
      %v558 = vld [vmem:[%s298 + $0x60] sm:$0xff]
      %v559 = vld [vmem:[%s298 + $0x68] sm:$0xff]
      %v560 = vld [vmem:[%s298 + $0x70] sm:$0xff]
      %v561 = vld [vmem:[%s298 + $0x78] sm:$0xff]
      %v562 = vld [vmem:[%s303] sm:$0x3]
      %564 = vset.pattern.permute.xlu0 0
      %565 = vperm.xlu0 %564, %v546
      %v566 = vpop.permute.xlu0 %565
      %569 = vset.pattern.permute.xlu0 0
      %570 = vperm.xlu0 %569, %v547
      %v571 = vpop.permute.xlu0 %570
      %574 = vset.pattern.permute.xlu0 0
      %575 = vperm.xlu0 %574, %v548
      %v576 = vpop.permute.xlu0 %575
      %579 = vset.pattern.permute.xlu0 0
      %580 = vperm.xlu0 %579, %v549
      %v581 = vpop.permute.xlu0 %580
      %584 = vset.pattern.permute.xlu0 0
      %585 = vperm.xlu0 %584, %v550
      %v586 = vpop.permute.xlu0 %585
      %589 = vset.pattern.permute.xlu0 0
      %590 = vperm.xlu0 %589, %v551
      %v591 = vpop.permute.xlu0 %590
      %594 = vset.pattern.permute.xlu0 0
      %595 = vperm.xlu0 %594, %v552
      %v596 = vpop.permute.xlu0 %595
      %599 = vset.pattern.permute.xlu0 0
      %600 = vperm.xlu0 %599, %v553
      %v601 = vpop.permute.xlu0 %600
      %604 = vset.pattern.permute.xlu0 0
      %605 = vperm.xlu0 %604, %v554
      %v606 = vpop.permute.xlu0 %605
      %609 = vset.pattern.permute.xlu0 0
      %610 = vperm.xlu0 %609, %v555
      %v611 = vpop.permute.xlu0 %610
      %614 = vset.pattern.permute.xlu0 0
      %615 = vperm.xlu0 %614, %v556
      %v616 = vpop.permute.xlu0 %615
      %619 = vset.pattern.permute.xlu0 0
      %620 = vperm.xlu0 %619, %v557
      %v621 = vpop.permute.xlu0 %620
      %624 = vset.pattern.permute.xlu0 0
      %625 = vperm.xlu0 %624, %v558
      %v626 = vpop.permute.xlu0 %625
      %629 = vset.pattern.permute.xlu0 0
      %630 = vperm.xlu0 %629, %v559
      %v631 = vpop.permute.xlu0 %630
      %634 = vset.pattern.permute.xlu0 0
      %635 = vperm.xlu0 %634, %v560
      %v636 = vpop.permute.xlu0 %635
      %639 = vset.pattern.permute.xlu0 0
      %640 = vperm.xlu0 %639, %v561
      %v641 = vpop.permute.xlu0 %640
      %v644 = vlaneseq
      %v645 = vshrl.u32 %v644, 7
      %v646 = vsub.s32 0, %v645
      %v647 = vrot.slane %v562, %v646
      %v648 = vlaneseq
      %v649 = vshrl.u32 %v648, 7
      %v650 = vsub.s32 1, %v649
      %v651 = vrot.slane %v562, %v650
      %v654 = vadd.f32 %v566, %v647
      %v655 = vadd.f32 %v566, %v651
      %v656 = vadd.f32 %v571, %v647
      %v657 = vadd.f32 %v571, %v651
      %v658 = vadd.f32 %v576, %v647
      %v659 = vadd.f32 %v576, %v651
      %v660 = vadd.f32 %v581, %v647
      %v661 = vadd.f32 %v581, %v651
      %v662 = vadd.f32 %v586, %v647
      %v663 = vadd.f32 %v586, %v651
      %v664 = vadd.f32 %v591, %v647
      %v665 = vadd.f32 %v591, %v651
      %v666 = vadd.f32 %v596, %v647
      %v667 = vadd.f32 %v596, %v651
      %v668 = vadd.f32 %v601, %v647
      %v669 = vadd.f32 %v601, %v651
      %v670 = vadd.f32 %v606, %v647
      %v671 = vadd.f32 %v606, %v651
      %v672 = vadd.f32 %v611, %v647
      %v673 = vadd.f32 %v611, %v651
      %v674 = vadd.f32 %v616, %v647
      %v675 = vadd.f32 %v616, %v651
      %v676 = vadd.f32 %v621, %v647
      %v677 = vadd.f32 %v621, %v651
      %v678 = vadd.f32 %v626, %v647
      %v679 = vadd.f32 %v626, %v651
      %v680 = vadd.f32 %v631, %v647
      %v681 = vadd.f32 %v631, %v651
      %v682 = vadd.f32 %v636, %v647
      %v683 = vadd.f32 %v636, %v651
      %v684 = vadd.f32 %v641, %v647
      %v685 = vadd.f32 %v641, %v651
      %v686 = vadd.f32 %v654, %v452
      %v687 = vadd.f32 %v655, %v454
      %v688 = vadd.f32 %v656, %v458
      %v689 = vadd.f32 %v657, %v460
      %v690 = vadd.f32 %v658, %v464
      %v691 = vadd.f32 %v659, %v466
      %v692 = vadd.f32 %v660, %v470
      %v693 = vadd.f32 %v661, %v472
      %v694 = vadd.f32 %v662, %v476
      %v695 = vadd.f32 %v663, %v478
      %v696 = vadd.f32 %v664, %v482
      %v697 = vadd.f32 %v665, %v484
      %v698 = vadd.f32 %v666, %v488
      %v699 = vadd.f32 %v667, %v490
      %v700 = vadd.f32 %v668, %v494
      %v701 = vadd.f32 %v669, %v496
      %v702 = vadd.f32 %v670, %v500
      %v703 = vadd.f32 %v671, %v502
      %v704 = vadd.f32 %v672, %v506
      %v705 = vadd.f32 %v673, %v508
      %v706 = vadd.f32 %v674, %v512
      %v707 = vadd.f32 %v675, %v514
      %v708 = vadd.f32 %v676, %v518
      %v709 = vadd.f32 %v677, %v520
      %v710 = vadd.f32 %v678, %v524
      %v711 = vadd.f32 %v679, %v526
      %v712 = vadd.f32 %v680, %v530
      %v713 = vadd.f32 %v681, %v532
      %v714 = vadd.f32 %v682, %v536
      %v715 = vadd.f32 %v683, %v538
      %v716 = vadd.f32 %v684, %v542
      %v717 = vadd.f32 %v685, %v544
      %v718 = vstv %s317
      %v719 = vmin.f32 %v686, %v718
      %v720 = vmin.f32 %v687, %v718
      %v721 = vmin.f32 %v688, %v718
      %v722 = vmin.f32 %v689, %v718
      %v723 = vmin.f32 %v690, %v718
      %v724 = vmin.f32 %v691, %v718
      %v725 = vmin.f32 %v692, %v718
      %v726 = vmin.f32 %v693, %v718
      %v727 = vmin.f32 %v694, %v718
      %v728 = vmin.f32 %v695, %v718
      %v729 = vmin.f32 %v696, %v718
      %v730 = vmin.f32 %v697, %v718
      %v731 = vmin.f32 %v698, %v718
      %v732 = vmin.f32 %v699, %v718
      %v733 = vmin.f32 %v700, %v718
      %v734 = vmin.f32 %v701, %v718
      %v735 = vmin.f32 %v702, %v718
      %v736 = vmin.f32 %v703, %v718
      %v737 = vmin.f32 %v704, %v718
      %v738 = vmin.f32 %v705, %v718
      %v739 = vmin.f32 %v706, %v718
      %v740 = vmin.f32 %v707, %v718
      %v741 = vmin.f32 %v708, %v718
      %v742 = vmin.f32 %v709, %v718
      %v743 = vmin.f32 %v710, %v718
      %v744 = vmin.f32 %v711, %v718
      %v745 = vmin.f32 %v712, %v718
      %v746 = vmin.f32 %v713, %v718
      %v747 = vmin.f32 %v714, %v718
      %v748 = vmin.f32 %v715, %v718
      %v749 = vmin.f32 %v716, %v718
      %v750 = vmin.f32 %v717, %v718
      %v751 = vmul.f32 %v719, 1.442695
      %v752 = vpow.pop %v751
      %v753 = vmul.f32 %v720, 1.442695
      %v754 = vpow.pop %v753
      %v755 = vmul.f32 %v721, 1.442695
      %v756 = vpow.pop %v755
      %v757 = vmul.f32 %v722, 1.442695
      %v758 = vpow.pop %v757
      %v759 = vmul.f32 %v723, 1.442695
      %v760 = vpow.pop %v759
      %v761 = vmul.f32 %v724, 1.442695
      %v762 = vpow.pop %v761
      %v763 = vmul.f32 %v725, 1.442695
      %v764 = vpow.pop %v763
      %v765 = vmul.f32 %v726, 1.442695
      %v766 = vpow.pop %v765
      %v767 = vmul.f32 %v727, 1.442695
      %v768 = vpow.pop %v767
      %v769 = vmul.f32 %v728, 1.442695
      %v770 = vpow.pop %v769
      %v771 = vmul.f32 %v729, 1.442695
      %v772 = vpow.pop %v771
      %v773 = vmul.f32 %v730, 1.442695
      %v774 = vpow.pop %v773
      %v775 = vmul.f32 %v731, 1.442695
      %v776 = vpow.pop %v775
      %v777 = vmul.f32 %v732, 1.442695
      %v778 = vpow.pop %v777
      %v779 = vmul.f32 %v733, 1.442695
      %v780 = vpow.pop %v779
      %v781 = vmul.f32 %v734, 1.442695
      %v782 = vpow.pop %v781
      %v783 = vmul.f32 %v735, 1.442695
      %v784 = vpow.pop %v783
      %v785 = vmul.f32 %v736, 1.442695
      %v786 = vpow.pop %v785
      %v787 = vmul.f32 %v737, 1.442695
      %v788 = vpow.pop %v787
      %v789 = vmul.f32 %v738, 1.442695
      %v790 = vpow.pop %v789
      %v791 = vmul.f32 %v739, 1.442695
      %v792 = vpow.pop %v791
      %v793 = vmul.f32 %v740, 1.442695
      %v794 = vpow.pop %v793
      %v795 = vmul.f32 %v741, 1.442695
      %v796 = vpow.pop %v795
      %v797 = vmul.f32 %v742, 1.442695
      %v798 = vpow.pop %v797
      %v799 = vmul.f32 %v743, 1.442695
      %v800 = vpow.pop %v799
      %v801 = vmul.f32 %v744, 1.442695
      %v802 = vpow.pop %v801
      %v803 = vmul.f32 %v745, 1.442695
      %v804 = vpow.pop %v803
      %v805 = vmul.f32 %v746, 1.442695
      %v806 = vpow.pop %v805
      %v807 = vmul.f32 %v747, 1.442695
      %v808 = vpow.pop %v807
      %v809 = vmul.f32 %v748, 1.442695
      %v810 = vpow.pop %v809
      %v811 = vmul.f32 %v749, 1.442695
      %v812 = vpow.pop %v811
      %v813 = vmul.f32 %v750, 1.442695
      %v814 = vpow.pop %v813
      %815 = vst [vmem:[%s314] sm:$0xff] %v752
      %816 = vst [vmem:[%s314 + $0x8] sm:$0xff] %v754
      %817 = vst [vmem:[%s314 + $0x10] sm:$0xff] %v756
      %818 = vst [vmem:[%s314 + $0x18] sm:$0xff] %v758
      %819 = vst [vmem:[%s314 + $0x20] sm:$0xff] %v760
      %820 = vst [vmem:[%s314 + $0x28] sm:$0xff] %v762
      %821 = vst [vmem:[%s314 + $0x30] sm:$0xff] %v764
      %822 = vst [vmem:[%s314 + $0x38] sm:$0xff] %v766
      %823 = vst [vmem:[%s314 + $0x40] sm:$0xff] %v768
      %824 = vst [vmem:[%s314 + $0x48] sm:$0xff] %v770
      %825 = vst [vmem:[%s314 + $0x50] sm:$0xff] %v772
      %826 = vst [vmem:[%s314 + $0x58] sm:$0xff] %v774
      %827 = vst [vmem:[%s314 + $0x60] sm:$0xff] %v776
      %828 = vst [vmem:[%s314 + $0x68] sm:$0xff] %v778
      %829 = vst [vmem:[%s314 + $0x70] sm:$0xff] %v780
      %830 = vst [vmem:[%s314 + $0x78] sm:$0xff] %v782
      %831 = vst [vmem:[%s314 + $0x80] sm:$0xff] %v784
      %832 = vst [vmem:[%s314 + $0x88] sm:$0xff] %v786
      %833 = vst [vmem:[%s314 + $0x90] sm:$0xff] %v788
      %834 = vst [vmem:[%s314 + $0x98] sm:$0xff] %v790
      %835 = vst [vmem:[%s314 + $0xa0] sm:$0xff] %v792
      %836 = vst [vmem:[%s314 + $0xa8] sm:$0xff] %v794
      %837 = vst [vmem:[%s314 + $0xb0] sm:$0xff] %v796
      %838 = vst [vmem:[%s314 + $0xb8] sm:$0xff] %v798
      %839 = vst [vmem:[%s314 + $0xc0] sm:$0xff] %v800
      %840 = vst [vmem:[%s314 + $0xc8] sm:$0xff] %v802
      %841 = vst [vmem:[%s314 + $0xd0] sm:$0xff] %v804
      %842 = vst [vmem:[%s314 + $0xd8] sm:$0xff] %v806
      %843 = vst [vmem:[%s314 + $0xe0] sm:$0xff] %v808
      %844 = vst [vmem:[%s314 + $0xe8] sm:$0xff] %v810
      %845 = vst [vmem:[%s314 + $0xf0] sm:$0xff] %v812
      %846 = vst [vmem:[%s314 + $0xf8] sm:$0xff] %v814
      %s847 = smul.u32 16, %s21
      %s848 = smul.u32 2, %s22
      %p849 = scmp.lt.s32.totalorder %s847, 31
      %s850 = scalar_select %p849, %s847, 31
      %p851 = scmp.lt.s32.totalorder %s848, 1
      %s852 = scalar_select %p851, %s848, 1
      %s853 = smul.addr %s850, 2
      %s854 = sadd.s32 %s852, %s853
      %s855 = smul.addr %s854, 8
      %s856 = scalar_lea.vmem %s5, %s855
      // Predicated region
      $region41: #{tpu_custom_call.1} parent=39 // pred_check
        %p857 = pneg %p174
      $region42: #{tpu_custom_call.1} parent=39 // pred_check_branch
        %859 = sbr.rel (%p857) target = $region44
      $region43: #{tpu_custom_call.1} parent=39 // pred_region
        %s860 = smul.u32 16, %s21
        %s861 = smul.u32 2, %s22
      $region44: #{tpu_custom_call.1} parent=39 // pred_fallthru
        _
    $region40: #{tpu_custom_call.1} parent=5 // pred_fallthru
      _
    %p862 = scmp.le.s32.totalorder 2, %s12
    // Predicated region
    $region45: #{tpu_custom_call.1} parent=5 // pred_check
      %p863 = pneg %p862
    $region46: #{tpu_custom_call.1} parent=5 // pred_check_branch
      %865 = sbr.rel (%p863) target = $region48
    $region47: #{tpu_custom_call.1} parent=5 // pred_region
      %s866 = ssub.s32 %s12, 2
      // Predicated region
      $region49: #{tpu_custom_call.1} parent=47 // pred_check
        %p867 = pneg %p180
      $region50: #{tpu_custom_call.1} parent=47 // pred_check_branch
        %869 = sbr.rel (%p867) target = $region52
      $region51: #{tpu_custom_call.1} parent=47 // pred_region
        %s870 = smul.u32 16, %s23
        %s871 = smul.u32 2, %s24
        %p872 = scmp.lt.s32.totalorder %s870, 31
        %s873 = scalar_select %p872, %s870, 31
        %p874 = scmp.lt.s32.totalorder %s871, 1
        %s875 = scalar_select %p874, %s871, 1
        %s876 = smul.addr %s873, 2
        %s877 = sadd.s32 %s875, %s876
        %s878 = smul.addr %s877, 8
        %s879 = scalar_lea.vmem %s5, %s878
      $region52: #{tpu_custom_call.1} parent=47 // pred_fallthru
        _
    $region48: #{tpu_custom_call.1} parent=5 // pred_fallthru
      _
  $region6: #{tpu_custom_call.1} parent=0 // loop_footer
    %s16 = sadd.s32 1, %s12
  $region7: #{tpu_custom_call.1} parent=0 // loop_footer_branch
    %11 = sbr.rel target = $region3
  $region8: #{tpu_custom_call.1} parent=0 // loop_exit
    _

</llo_original>
